<compile_context>
chip_gen: v5e
topology: v5e:2x2
jax: 0.10.0
libtpu: 0.0.40
codegen_flags: <defaults>
</compile_context>

<pallas_src>
import functools
import math

import jax
import jax.numpy as jnp
from jax.experimental import pallas as pl
from jax.experimental.pallas import tpu as pltpu


_VMEM_LIMIT_BYTES = 64 * 1024 * 1024  # fits v7x physical VMEM; well above default scoped limit


def _pick_tile(n, candidates):
    """Largest candidate tile that evenly divides n, else the full extent."""
    for c in candidates:
        if n % c == 0:
            return c
    return n


# ----------------------------------------------------------------------------
# Linear projection kernel:  y = (x @ W + b) * scale
# ----------------------------------------------------------------------------
def linear_kernel(x_ref, w_ref, b_ref, o_ref, *, scale):
    w = w_ref[...]
    x = x_ref[...].astype(w.dtype)           # bf16 matmul operands when enabled
    y = jnp.dot(x, w, preferred_element_type=jnp.float32)
    y = y + b_ref[...].astype(jnp.float32)
    if scale != 1.0:                          # static python float -> traced once
        y = y * scale
    o_ref[...] = y.astype(o_ref.dtype)


def _linear(x, w, b, *, scale=1.0, out_dtype=None):
    rows, in_f = x.shape
    out_f = w.shape[1]
    out_dtype = out_dtype or x.dtype
    tr = _pick_tile(rows, (512, 256, 128))

    kernel = functools.partial(linear_kernel, scale=scale)
    return pl.pallas_call(
        kernel,
        out_shape=jax.ShapeDtypeStruct((rows, out_f), out_dtype),
        grid_spec=pltpu.PrefetchScalarGridSpec(
            num_scalar_prefetch=0,
            grid=(rows // tr,),
            in_specs=[
                pl.BlockSpec((tr, in_f), lambda i: (i, 0)),
                pl.BlockSpec((in_f, out_f), lambda i: (0, 0)),   # resident weight
                pl.BlockSpec((1, out_f), lambda i: (0, 0)),      # resident bias
            ],
            out_specs=pl.BlockSpec((tr, out_f), lambda i: (i, 0)),
        ),
        compiler_params=pltpu.CompilerParams(
            dimension_semantics=("parallel",),
            vmem_limit_bytes=_VMEM_LIMIT_BYTES),
    )(x, w, b)


# ----------------------------------------------------------------------------
# Flash attention kernel (heads batched) with fused output projection.
#   q: (h, tq, d_k)  (already scaled by 1/sqrt(d_k))
#   k: (h, tk, d_k)   v: (h, tk, d_v)
#   wo3: (h, d_v, d_model)   bo: (1, d_model)
#   out: (tq, d_model)
# ----------------------------------------------------------------------------
def flash_attn_kernel(q_ref, k_ref, v_ref, wo_ref, bo_ref, out_ref,
                      m_sc, l_sc, acc_sc):
    ki = pl.program_id(2)

    @pl.when(ki == 0)
    def _():
        m_sc[...] = jnp.full_like(m_sc, -jnp.inf)
        l_sc[...] = jnp.zeros_like(l_sc)
        acc_sc[...] = jnp.zeros_like(acc_sc)

    q = q_ref[...]                                   # (h, tq, d_k)
    k = k_ref[...]                                   # (h, tk, d_k)
    v = v_ref[...]                                   # (h, tk, d_v)

    # Head-batched QK^T on the MXU; scores accumulated/kept in f32.
    s = jnp.einsum('hqd,hkd->hqk', q, k,
                   preferred_element_type=jnp.float32)        # (h, tq, tk)

    m_prev = m_sc[...]
    m_new = jnp.maximum(m_prev, s.max(axis=-1, keepdims=True))
    alpha = jnp.exp(m_prev - m_new)
    p = jnp.exp(s - m_new)                                     # f32 softmax numerator

    l_sc[...] = alpha * l_sc[...] + p.sum(axis=-1, keepdims=True)
    acc_sc[...] = alpha * acc_sc[...] + jnp.einsum(
        'hqk,hkv->hqv', p.astype(v.dtype), v,
        preferred_element_type=jnp.float32)                    # (h, tq, d_v)
    m_sc[...] = m_new

    @pl.when(ki == pl.num_programs(2) - 1)
    def _():
        inv_l = pl.reciprocal(l_sc[...], approx=True)          # EUP, not VALU divide
        o = acc_sc[...] * inv_l                                # (h, tq, d_v) f32
        wo = wo_ref[...]                                       # (h, d_v, d_model)
        # Fused fc_o: per-head matmul then sum over heads == concat(heads) @ Wo.
        out = jnp.einsum('hqv,hvm->hqm', o.astype(wo.dtype), wo,
                         preferred_element_type=jnp.float32).sum(axis=0)
        out = out + bo_ref[...].astype(jnp.float32)
        out_ref[...] = out.astype(out_ref.dtype)


def _flash_attention(q, k, v, wo3, bo, *, out_dtype):
    b_s, h, nq, d_k = q.shape
    nk = k.shape[2]
    d_v = v.shape[3]
    d_model = wo3.shape[2]

    tq = _pick_tile(nq, (256, 128))
    tk = _pick_tile(nk, (256, 128))
    grid = (b_s, nq // tq, nk // tk)

    return pl.pallas_call(
        flash_attn_kernel,
        out_shape=jax.ShapeDtypeStruct((b_s, nq, d_model), out_dtype),
        grid_spec=pltpu.PrefetchScalarGridSpec(
            num_scalar_prefetch=0,
            grid=grid,
            in_specs=[
                pl.BlockSpec((None, h, tq, d_k), lambda b, qi, ki: (b, 0, qi, 0)),
                pl.BlockSpec((None, h, tk, d_k), lambda b, qi, ki: (b, 0, ki, 0)),
                pl.BlockSpec((None, h, tk, d_v), lambda b, qi, ki: (b, 0, ki, 0)),
                pl.BlockSpec((h, d_v, d_model), lambda b, qi, ki: (0, 0, 0)),  # resident Wo
                pl.BlockSpec((1, d_model), lambda b, qi, ki: (0, 0)),          # resident bo
            ],
            out_specs=pl.BlockSpec((None, tq, d_model), lambda b, qi, ki: (b, qi, 0)),
            scratch_shapes=[
                pltpu.VMEM((h, tq, 1), jnp.float32),    # running max m
                pltpu.VMEM((h, tq, 1), jnp.float32),    # running sum l
                pltpu.VMEM((h, tq, d_v), jnp.float32),  # running output accumulator
            ],
        ),
        compiler_params=pltpu.CompilerParams(
            dimension_semantics=("parallel", "parallel", "arbitrary"),
            vmem_limit_bytes=_VMEM_LIMIT_BYTES),
    )(q, k, v, wo3, bo)


# ----------------------------------------------------------------------------
# Full forward (matches the PyTorch module with mask=None, weights=None, eval mode)
# ----------------------------------------------------------------------------
def scaled_dot_product_attention(queries, keys, values, params, *,
                                 d_k, d_v, h, use_bf16=False):
    b_s, nq, d_model = queries.shape
    nk = keys.shape[1]
    wq, bq, wk, bk, wv, bv, wo, bo = params

    cdt = jnp.bfloat16 if use_bf16 else jnp.float32   # matmul-operand dtype
    scale = 1.0 / math.sqrt(d_k)

    # Projections (scale folded into Q).
    q2 = _linear(queries.reshape(b_s * nq, d_model), wq.astype(cdt), bq,
                 scale=scale, out_dtype=cdt)
    k2 = _linear(keys.reshape(b_s * nk, d_model), wk.astype(cdt), bk, out_dtype=cdt)
    v2 = _linear(values.reshape(b_s * nk, d_model), wv.astype(cdt), bv, out_dtype=cdt)

    # Layout plumbing to head-major (pure XLA reshapes/transposes, as in the torch module).
    q4 = q2.reshape(b_s, nq, h, d_k).transpose(0, 2, 1, 3)   # (b_s, h, nq, d_k)
    k4 = k2.reshape(b_s, nk, h, d_k).transpose(0, 2, 1, 3)   # (b_s, h, nk, d_k)
    v4 = v2.reshape(b_s, nk, h, d_v).transpose(0, 2, 1, 3)   # (b_s, h, nk, d_v)

    wo3 = wo.reshape(h, d_v, d_model).astype(cdt)            # per-head slices of Wo

    return _flash_attention(q4, k4, v4, wo3, bo, out_dtype=queries.dtype)


def init_params(key, d_model, d_k, d_v, h):
    # Matches the module's init: Linear weights ~ N(0, 0.001), biases = 0.
    # Weights stored transposed: (in_features, out_features).
    k1, k2, k3, k4 = jax.random.split(key, 4)
    std = 0.001
    wq = std * jax.random.normal(k1, (d_model, h * d_k), jnp.float32)
    wk = std * jax.random.normal(k2, (d_model, h * d_k), jnp.float32)
    wv = std * jax.random.normal(k3, (d_model, h * d_v), jnp.float32)
    wo = std * jax.random.normal(k4, (h * d_v, d_model), jnp.float32)
    bq = jnp.zeros((1, h * d_k), jnp.float32)
    bk = jnp.zeros((1, h * d_k), jnp.float32)
    bv = jnp.zeros((1, h * d_v), jnp.float32)
    bo = jnp.zeros((1, d_model), jnp.float32)
    return (wq, bq, wk, bk, wv, bv, wo, bo)


def reference(queries, keys, values, params, *, d_k, d_v, h):
    # Pure-JAX reference of the PyTorch forward (eval mode, no mask/weights), full f32 matmuls.
    hp = jax.lax.Precision.HIGHEST
    wq, bq, wk, bk, wv, bv, wo, bo = params
    b_s, nq, _ = queries.shape
    nk = keys.shape[1]
    q = (jnp.matmul(queries, wq, precision=hp) + bq).reshape(b_s, nq, h, d_k).transpose(0, 2, 1, 3)
    k = (jnp.matmul(keys, wk, precision=hp) + bk).reshape(b_s, nk, h, d_k).transpose(0, 2, 3, 1)
    v = (jnp.matmul(values, wv, precision=hp) + bv).reshape(b_s, nk, h, d_v).transpose(0, 2, 1, 3)
    att = jnp.matmul(q, k, precision=hp) / math.sqrt(d_k)
    att = jax.nn.softmax(att, axis=-1)
    out = jnp.matmul(att, v, precision=hp).transpose(0, 2, 1, 3).reshape(b_s, nq, h * d_v)
    return jnp.matmul(out, wo, precision=hp) + bo


def _run_case(d_model, d_k, d_v, h, b_s, nq, nk, seed, atol, rtol):
    key = jax.random.PRNGKey(seed)
    kq, kk, kv, kp = jax.random.split(key, 4)
    queries = jax.random.normal(kq, (b_s, nq, d_model), jnp.float32)
    keys = jax.random.normal(kk, (b_s, nk, d_model), jnp.float32)
    values = jax.random.normal(kv, (b_s, nk, d_model), jnp.float32)
    params = init_params(kp, d_model, d_k, d_v, h)

    out = scaled_dot_product_attention(queries, keys, values, params,
                                       d_k=d_k, d_v=d_v, h=h, use_bf16=False)
    out = jax.block_until_ready(out)

    ref = reference(queries, keys, values, params, d_k=d_k, d_v=d_v, h=h)
    assert out.shape == (b_s, nq, d_model)
    assert jnp.allclose(out, ref, atol=atol, rtol=rtol), "mismatch vs JAX reference"


if __name__ == "__main__":
    # Small config from the original test (single k-tile path).
    _run_case(d_model=32, d_k=16, d_v=16, h=4, b_s=2, nq=8, nk=8,
              seed=0, atol=1e-5, rtol=1e-5)
    # Larger, 128-aligned config exercising the tiled / online-softmax reduction path
    # (grid has 2 nk tiles, lane-dense output).
    _run_case(d_model=128, d_k=64, d_v=64, h=8, b_s=2, nq=256, nk=512,
              seed=1, atol=1e-5, rtol=1e-2)

    print("KERNEL_OK")
</pallas_src>

<mosaic_0001>
module attributes {stable_mosaic.version = 11 : i64} {
  func.func @linear_kernel(%arg0: i32, %arg1: memref<16x32xf32, #tpu.memory_space<vmem>>, %arg2: memref<32x64xf32, #tpu.memory_space<vmem>>, %arg3: memref<1x64xf32, #tpu.memory_space<vmem>>, %arg4: memref<16x64xf32, #tpu.memory_space<vmem>>) attributes {dimension_semantics = [#tpu.dimension_semantics<parallel>], iteration_bounds = array<i64: 1>, scalar_prefetch = 0 : i64, scratch_operands = 0 : i64, tpu.core_type = #tpu.core_type<tc>, window_params = [{transform_indices = @transform_0, window_bounds = array<i64: 16, 32>}, {pipeline_mode = #tpu.pipeline_mode<synchronous>, transform_indices = @transform_1, window_bounds = array<i64: 32, 64>}, {pipeline_mode = #tpu.pipeline_mode<synchronous>, transform_indices = @transform_2, window_bounds = array<i64: 1, 64>}, {transform_indices = @transform_3, window_bounds = array<i64: 16, 64>}]} {
    %c0 = arith.constant 0 : index
    %c0_0 = arith.constant 0 : index
    %0 = vector.load %arg2[%c0, %c0_0] : memref<32x64xf32, #tpu.memory_space<vmem>>, vector<32x64xf32>
    %c0_1 = arith.constant 0 : index
    %c0_2 = arith.constant 0 : index
    %1 = vector.load %arg1[%c0_1, %c0_2] : memref<16x32xf32, #tpu.memory_space<vmem>>, vector<16x32xf32>
    %cst = arith.constant dense<0.000000e+00> : vector<16x64xf32>
    %2 = tpu.matmul %1, %0, %cst {dimension_numbers = #tpu.dot_dimension_numbers<[1], [0], [0], [1], [0, 0, 1, 1], [], []>} : vector<16x32xf32>, vector<32x64xf32>, vector<16x64xf32> -> vector<16x64xf32>
    %c0_3 = arith.constant 0 : index
    %c0_4 = arith.constant 0 : index
    %3 = vector.load %arg3[%c0_3, %c0_4] : memref<1x64xf32, #tpu.memory_space<vmem>>, vector<1x64xf32>
    %4 = vector.broadcast %3 : vector<1x64xf32> to vector<16x64xf32>
    %5 = arith.addf %2, %4 : vector<16x64xf32>
    %cst_5 = arith.constant 2.500000e-01 : f32
    %6 = vector.broadcast %cst_5 : f32 to vector<16x64xf32>
    %7 = arith.mulf %5, %6 : vector<16x64xf32>
    %c0_6 = arith.constant 0 : index
    %c0_7 = arith.constant 0 : index
    %8 = vector.load %arg4[%c0_6, %c0_7] : memref<16x64xf32, #tpu.memory_space<vmem>>, vector<16x64xf32>
    tpu.vector_store %arg4[%c0_6, %c0_7], %7 {strides = array<i32>} : memref<16x64xf32, #tpu.memory_space<vmem>>, vector<16x64xf32>,
    return
  }
  func.func @transform_0(%arg0: i32) -> (i32, i32) {
    %c0_i32 = arith.constant 0 : i32
    %c0_i32_0 = arith.constant 0 : i32
    return %arg0, %c0_i32 : i32, i32
  }
  func.func @transform_1(%arg0: i32) -> (i32, i32) {
    %c0_i32 = arith.constant 0 : i32
    %c0_i32_0 = arith.constant 0 : i32
    %c0_i32_1 = arith.constant 0 : i32
    return %c0_i32, %c0_i32_0 : i32, i32
  }
  func.func @transform_2(%arg0: i32) -> (i32, i32) {
    %c0_i32 = arith.constant 0 : i32
    %c0_i32_0 = arith.constant 0 : i32
    %c0_i32_1 = arith.constant 0 : i32
    return %c0_i32, %c0_i32_0 : i32, i32
  }
  func.func @transform_3(%arg0: i32) -> (i32, i32) {
    %c0_i32 = arith.constant 0 : i32
    %c0_i32_0 = arith.constant 0 : i32
    return %arg0, %c0_i32 : i32, i32
  }
}

</mosaic_0001>

<llo_original>
// kernel: tpu_custom_call.1
$region0: #{tpu_custom_call.1}
  #allocation0 [shape = 'u32[]', space=smem, size = 0x4, offset = 0x4, fixed_abs, tag = 'smem constant byte address 0x4 - core index']
  #allocation1 [shape = 'u32[72,128]{1,0:T(1,128)}', space=vmem, size = 0x9000, scoped, tag = 'internal scratch']
  %s0 = inlined_call_operand.hbm [shape: f32[16,32], index: 0, kind: input, shape index: {}]
  %s1 = inlined_call_operand.hbm [shape: f32[32,64], index: 1, kind: input, shape index: {}]
  %s2 = inlined_call_operand.vmem [shape: f32[1,64], index: 2, kind: input, shape index: {}]
  %s3 = inlined_call_operand.hbm [shape: f32[16,64], index: 3, kind: output, shape index: {}]
  %s4 = sld [smem:[#allocation0]]
  $region30: #{tpu_custom_call.1} parent=0
    _
  %s6 = ssub.s32 1, %s4
  %s7 = scalar_select 0, %s6, %s4
  $region1: #{tpu_custom_call.1} parent=0
    #allocation2 [shape = 'u8[8192]{0}', space=vmem, size = 0x2000, scoped, tag = 'input window, operand 0, single buffered']
    #allocation3 [shape = 's32[1]{0}', space=sflag, size = 0x4, scoped, tag = 'scoped memory for tpu_custom_call.1']
    #allocation4 [shape = 's32[1]{0}', space=sflag, size = 0x4, scoped, tag = 'scoped memory for tpu_custom_call.1']
    #allocation5 [shape = 'u8[16384]{0}', space=vmem, size = 0x4000, scoped, tag = 'input window, operand 1, single buffered']
    #allocation6 [shape = 's32[1]{0}', space=sflag, size = 0x4, scoped, tag = 'scoped memory for tpu_custom_call.1']
    #allocation7 [shape = 'u8[8192]{0}', space=vmem, size = 0x2000, scoped, tag = 'output window, operand 0, single buffered']
    %8 = vsyncpa [#allocation3], 0
    %9 = vsyncpa [#allocation6], 0
    %10 = vsyncpa [#allocation4], 0
    // Predicated region
    $region2: #{tpu_custom_call.1} parent=1 // pred_check
      _
    $region3: #{tpu_custom_call.1} parent=1 // pred_check_branch
      %12 = sbr.rel (0) target = $region5
    $region4: #{tpu_custom_call.1} parent=1 // pred_region
      %14 = vsyncadd [#allocation3], 0
      %s15 = sshll.u32 %s0, 4
      %s16 = int_to_ptr.hbm [resolvable:$true] %s15
      %s17 = sshll.u32 [#allocation2], 4
      %s18 = int_to_ptr.vmem [resolvable:$true] %s17
      %23 = dma.hbm_to_vmem [thread:$0]  %s16, 256, %s18, [#allocation3], 128, 128, 8
    $region5: #{tpu_custom_call.1} parent=1 // pred_fallthru
      _
    // Predicated region
    $region6: #{tpu_custom_call.1} parent=1 // pred_check
      _
    $region7: #{tpu_custom_call.1} parent=1 // pred_check_branch
      %25 = sbr.rel (0) target = $region9
    $region8: #{tpu_custom_call.1} parent=1 // pred_region
      %27 = vsyncadd [#allocation6], 0
      %s28 = sshll.u32 %s1, 4
      %s29 = int_to_ptr.hbm [resolvable:$true] %s28
      %s30 = sshll.u32 [#allocation5], 4
      %s31 = int_to_ptr.vmem [resolvable:$true] %s30
      %36 = dma.hbm_to_vmem [thread:$0]  %s29, 512, %s31, [#allocation6], 128, 128, 8
    $region9: #{tpu_custom_call.1} parent=1 // pred_fallthru
      _
    // Predicated region
    $region10: #{tpu_custom_call.1} parent=1 // pred_check
      _
    $region11: #{tpu_custom_call.1} parent=1 // pred_check_branch
      %38 = sbr.rel (0) target = $region13
    $region12: #{tpu_custom_call.1} parent=1 // pred_region
      _
    $region13: #{tpu_custom_call.1} parent=1 // pred_fallthru
      _
    // Predicated region
    $region14: #{tpu_custom_call.1} parent=1 // pred_check
      _
    $region15: #{tpu_custom_call.1} parent=1 // pred_check_branch
      %40 = sbr.rel (0) target = $region17
    $region16: #{tpu_custom_call.1} parent=1 // pred_region
      %42 = dma.done [#allocation3], 256
    $region17: #{tpu_custom_call.1} parent=1 // pred_fallthru
      _
    // Predicated region
    $region18: #{tpu_custom_call.1} parent=1 // pred_check
      _
    $region19: #{tpu_custom_call.1} parent=1 // pred_check_branch
      %44 = sbr.rel (0) target = $region21
    $region20: #{tpu_custom_call.1} parent=1 // pred_region
      %46 = dma.done [#allocation6], 512
    $region21: #{tpu_custom_call.1} parent=1 // pred_fallthru
      _
    %v47 = vld [vmem:[#allocation5] sm:$0xff]
    %v48 = vld [vmem:[#allocation5 + $0x8] sm:$0xff]
    %v49 = vld [vmem:[#allocation5 + $0x10] sm:$0xff]
    %v50 = vld [vmem:[#allocation5 + $0x18] sm:$0xff]
    %v51 = vld [vmem:[#allocation2] sm:$0xff]
    %v52 = vld [vmem:[#allocation2 + $0x8] sm:$0xff]
    %v53 = vld [vmem:[%s2] sm:$0x1]
    %v55 = vperm.slane %v53, 0
    %vm57 = vcmask 261120
    %v59 = vsel %vm57, %v51, 0
    %v62 = vsel %vm57, %v52, 0
    %64 = vmatpush.msra.mxu0 0.0
    %65 = vmatpush.msra.mxu0 0.0
    %66 = vmatpush.msra.mxu0 0.0
    %67 = vmatpush.msra.mxu0 0.0
    %68 = vmatpush.msra.mxu0 0.0
    %69 = vmatpush.msra.mxu0 0.0
    %70 = vmatpush.msra.mxu0 0.0
    %71 = vmatpush.msra.mxu0 0.0
    %72 = vmatpush.msra.mxu0 0.0
    %73 = vmatpush.msra.mxu0 0.0
    %74 = vmatpush.msra.mxu0 0.0
    %75 = vmatpush.msra.mxu0 0.0
    %76 = vmatpush.msra.mxu0 %v50
    %77 = vmatpush.msra.mxu0 %v49
    %78 = vmatpush.msra.mxu0 %v48
    %79 = vmatpush.msra.mxu0 %v47
    %80 = vmatmul.f32.gmra.mxu0 %v59
    %v81 = vpop.f32.mrf.mxu0
    %v82 = vadd.f32 %v55, %v81
    %83 = vmatmul.f32.gmra.mxu0 %v62
    %v84 = vpop.f32.mrf.mxu0
    %v85 = vadd.f32 %v55, %v84
    %86 = vdwg.mxu0
    %v87 = vmul.f32 %v82, 0.25
    %v88 = vmul.f32 %v85, 0.25
    %vm89 = vcmask 523264
    %90 = vst.msk [vmem:[#allocation7] sm:$0xff] %vm89, %v87
    %91 = vst.msk [vmem:[#allocation7 + $0x8] sm:$0xff] %vm89, %v88
    // Predicated region
    $region22: #{tpu_custom_call.1} parent=1 // pred_check
      _
    $region23: #{tpu_custom_call.1} parent=1 // pred_check_branch
      %93 = sbr.rel (0) target = $region25
    $region24: #{tpu_custom_call.1} parent=1 // pred_region
      %95 = vsyncadd [#allocation4], 0
      %s96 = sshll.u32 [#allocation7], 4
      %s97 = int_to_ptr.vmem [resolvable:$true] %s96
      %s98 = sshll.u32 %s3, 4
      %s99 = int_to_ptr.hbm [resolvable:$true] %s98
      %104 = dma.vmem_to_hbm [thread:$0]  %s97, 256, %s99, [#allocation4], 128, 128, 8
    $region25: #{tpu_custom_call.1} parent=1 // pred_fallthru
      _
    // Predicated region
    $region26: #{tpu_custom_call.1} parent=1 // pred_check
      _
    $region27: #{tpu_custom_call.1} parent=1 // pred_check_branch
      %106 = sbr.rel (0) target = $region29
    $region28: #{tpu_custom_call.1} parent=1 // pred_region
      %108 = dma.done [#allocation4], 256
    $region29: #{tpu_custom_call.1} parent=1 // pred_fallthru
      _
    %109 = vsyncpa [#allocation3], 1
    %110 = vsyncpa [#allocation6], 1
    %111 = vsyncpa [#allocation4], 1

</llo_original>
